<compile_context>
chip_gen: v7x
topology: tpu7x:2x2x1
jax: 0.10.0
libtpu: 0.0.40
codegen_flags: <defaults>
</compile_context>

<pallas_src>
import functools
import math

import jax
import jax.numpy as jnp
from jax.experimental import pallas as pl
from jax.experimental.pallas import tpu as pltpu


def _round_up(x, m):
    return (x + m - 1) // m * m


def _vmem_capacity_bytes():
    try:
        return int(pltpu.get_tpu_info().vmem_capacity_bytes)
    except Exception:
        return 64 * 1024 * 1024  # conservative: v7x per-TC VMEM


# ---------------------------------------------------------------------------
# Kernels
# ---------------------------------------------------------------------------
def _linear_kernel_f32out(x_ref, w_ref, b_ref, o_ref, *, compute_dtype):
    """f32 output: accumulate directly into the resident output tile."""
    k = pl.program_id(2)

    @pl.when(k == 0)
    def _init():
        o_ref[...] = jnp.zeros_like(o_ref)

    o_ref[...] += jnp.dot(
        x_ref[...].astype(compute_dtype),
        w_ref[...].astype(compute_dtype),
        preferred_element_type=jnp.float32,
    )

    @pl.when(k == pl.num_programs(2) - 1)
    def _finalize():
        o_ref[...] += b_ref[...].astype(jnp.float32)


def _linear_kernel_scratch(x_ref, w_ref, b_ref, o_ref, acc_ref, *, compute_dtype):
    """Low-precision output: f32 scratch accumulator, cast on the last K step."""
    k = pl.program_id(2)

    @pl.when(k == 0)
    def _init():
        acc_ref[...] = jnp.zeros_like(acc_ref)

    acc_ref[...] += jnp.dot(
        x_ref[...].astype(compute_dtype),
        w_ref[...].astype(compute_dtype),
        preferred_element_type=jnp.float32,
    )

    @pl.when(k == pl.num_programs(2) - 1)
    def _finalize():
        o_ref[...] = (acc_ref[...] + b_ref[...].astype(jnp.float32)).astype(o_ref.dtype)


# ---------------------------------------------------------------------------
# Tile selection (generation aware, asymmetric tm >= tn)
# ---------------------------------------------------------------------------
def _pick_tiles(M, N, K, x_isz, w_isz, out_isz, needs_scratch, vmem_budget):
    sub = max(8, (32 // min(x_isz, 4)) * 8)  # sublane granularity of stored x dtype
    M_r = _round_up(M, sub)
    N_r = _round_up(N, 128)
    K_r = _round_up(K, 128)

    # Preferred tiles:
    #  - decode / small-M: weight-bandwidth-bound -> maximize tn*tk per step.
    #  - large-M with big VMEM (v5e/v6e): tm=1024 cuts weight re-streaming in half.
    #  - otherwise: 512/512/1024 (safe on v7x's 64 MiB).
    if M_r <= 64:
        pref = (M_r, 512, 2048)
    elif M_r >= 1024 and vmem_budget >= 96 * 1024 * 1024:
        pref = (1024, 512, 1024)
    else:
        pref = (512, 512, 1024)

    tm = min(pref[0], M_r)
    tn = min(pref[1], N_r)
    tk = min(pref[2], K_r)

    def vmem_use(tm_, tn_, tk_):
        use = 2 * tm_ * tk_ * x_isz + 2 * tk_ * tn_ * w_isz + 2 * tm_ * tn_ * out_isz
        if needs_scratch:
            use += tm_ * tn_ * 4
        return use

    budget = int(vmem_budget * 0.6)
    while vmem_use(tm, tn, tk) > budget and tk > 256:
        tk = max(256, _round_up(tk // 2, 128))
    while vmem_use(tm, tn, tk) > budget and tn > 256:
        tn = max(256, _round_up(tn // 2, 128))
    while vmem_use(tm, tn, tk) > budget and tm > 256:
        tm = max(256, _round_up(tm // 2, sub))

    # Megacore (v7x, 2 TCs): make sure a parallel axis has >= 2 steps when M
    # collapses to a single tile; otherwise one TensorCore sits idle.
    if M_r // tm <= 1 and _round_up(N, tn) // tn < 2 and N_r >= 256:
        tn = _round_up(max(128, N_r // 2), 128)

    return tm, tn, tk


# ---------------------------------------------------------------------------
# Public wrapper (forward of IPEXTransformerLinear)
# ---------------------------------------------------------------------------
def ipex_transformer_linear(x, weight, bias=None, *, mxu_dtype="bfloat16"):
    """out = x @ weight (+ bias), x [..., K], weight [K, N], bias [N].

    mxu_dtype: dtype fed to the MXU (default bf16, f32 accumulation).  Pass
    None to keep the input dtype on the MXU (exact-precision path).
    """
    *lead, K = x.shape
    Kw, N = weight.shape
    assert K == Kw, f"in_features mismatch: {K} vs {Kw}"

    M = math.prod(lead) if lead else 1
    x2d = x.reshape(M, K)

    out_dtype = x.dtype
    compute_dtype = jnp.dtype(mxu_dtype) if mxu_dtype is not None else jnp.dtype(x.dtype)

    x_isz = jnp.dtype(x.dtype).itemsize
    w_isz = jnp.dtype(weight.dtype).itemsize
    out_isz = jnp.dtype(out_dtype).itemsize
    needs_scratch = jnp.dtype(out_dtype) != jnp.float32

    vmem_cap = _vmem_capacity_bytes()
    tm_, tn_, tk_ = _pick_tiles(M, N, K, x_isz, w_isz, out_isz, needs_scratch, vmem_cap)

    M_pad = _round_up(M, tm_)
    N_pad = _round_up(N, tn_)
    K_pad = _round_up(K, tk_)

    # Pad only when necessary (padded K contributes 0 to the dot).
    if (M_pad, K_pad) != (M, K):
        x2d = jnp.pad(x2d, ((0, M_pad - M), (0, K_pad - K)))
    w_p = weight
    if (K_pad, N_pad) != (K, N):
        w_p = jnp.pad(weight, ((0, K_pad - K), (0, N_pad - N)))

    if bias is not None:
        b2d = bias.reshape(1, N)
        if N_pad != N:
            b2d = jnp.pad(b2d, ((0, 0), (0, N_pad - N)))
    else:
        b2d = jnp.zeros((1, N_pad), dtype=jnp.float32)

    grid_m, grid_n, grid_k = M_pad // tm_, N_pad // tn_, K_pad // tk_
    grid = (grid_m, grid_n, grid_k)

    x_spec = pl.BlockSpec((tm_, tk_), lambda i, j, k: (i, k))
    w_spec = pl.BlockSpec((tk_, tn_), lambda i, j, k: (k, j))
    b_spec = pl.BlockSpec((1, tn_), lambda i, j, k: (0, j))
    o_spec = pl.BlockSpec((tm_, tn_), lambda i, j, k: (i, j))

    out_shape = jax.ShapeDtypeStruct((M_pad, N_pad), out_dtype)

    # Cost estimate including operand revisits (x is re-read grid_n times,
    # W is re-read grid_m times with this grid order).
    cost = pl.CostEstimate(
        flops=2 * M * K * N,
        transcendentals=0,
        bytes_accessed=int(
            M_pad * K_pad * x_isz * grid_n
            + K_pad * N_pad * w_isz * grid_m
            + N_pad * 4 * grid_m
            + M_pad * N_pad * out_isz
        ),
    )
    cparams = pltpu.CompilerParams(
        dimension_semantics=("parallel", "parallel", "arbitrary"),
        vmem_limit_bytes=min(vmem_cap * 3 // 4, 96 * 1024 * 1024),
    )

    if needs_scratch:
        kernel = functools.partial(_linear_kernel_scratch, compute_dtype=compute_dtype)
        scratch = [pltpu.VMEM((tm_, tn_), jnp.float32)]
    else:
        kernel = functools.partial(_linear_kernel_f32out, compute_dtype=compute_dtype)
        scratch = []

    out = pl.pallas_call(
        kernel,
        out_shape=out_shape,
        grid_spec=pltpu.PrefetchScalarGridSpec(
            num_scalar_prefetch=0,
            grid=grid,
            in_specs=[x_spec, w_spec, b_spec],
            out_specs=o_spec,
            scratch_shapes=scratch,
        ),
        compiler_params=cparams,
        cost_estimate=cost,
    )(x2d, w_p, b2d)

    if (M_pad, N_pad) != (M, N):
        out = out[:M, :N]
    return out.reshape(*lead, N)


# ---------------------------------------------------------------------------
# Self-test
# ---------------------------------------------------------------------------
if __name__ == "__main__":
    key = jax.random.PRNGKey(0)
    k1, k2, k3, k4, k5, k6 = jax.random.split(key, 6)

    # ---- Test 1: small transformer-ish shapes (single-tile grid) ----
    batch, seq, in_f, out_f = 2, 8, 32, 64
    x = jax.random.normal(k1, (batch, seq, in_f), dtype=jnp.float32)
    w = jax.random.normal(k2, (in_f, out_f), dtype=jnp.float32) * 0.05
    b = jax.random.normal(k3, (out_f,), dtype=jnp.float32) * 0.1

    ref32 = jnp.einsum("bsk,kn->bsn", x, w, precision=jax.lax.Precision.HIGHEST) + b
    ref32_nb = jnp.einsum("bsk,kn->bsn", x, w, precision=jax.lax.Precision.HIGHEST)

    # default: bf16 MXU operands, f32 accumulation
    out = jax.block_until_ready(ipex_transformer_linear(x, w, b))
    assert out.shape == (batch, seq, out_f)
    assert jnp.max(jnp.abs(out - ref32)) < 2e-2, "mismatch (small, bf16 MXU)"

    # exact-dtype path (f32 operands)
    out_f32 = jax.block_until_ready(ipex_transformer_linear(x, w, b, mxu_dtype=None))
    assert jnp.allclose(out_f32, ref32, atol=1e-4, rtol=1e-4), "mismatch (small, f32)"

    # no-bias path
    out_nb = jax.block_until_ready(ipex_transformer_linear(x, w, None, mxu_dtype=None))
    assert jnp.allclose(out_nb, ref32_nb, atol=1e-4, rtol=1e-4), "mismatch (no bias)"

    # bf16 in/out (exercises the scratch-accumulator kernel)
    xb, wb, bb = x.astype(jnp.bfloat16), w.astype(jnp.bfloat16), b.astype(jnp.bfloat16)
    out_bf = jax.block_until_ready(ipex_transformer_linear(xb, wb, bb))
    ref_bf = (
        jnp.einsum(
            "bsk,kn->bsn",
            xb.astype(jnp.float32),
            wb.astype(jnp.float32),
            precision=jax.lax.Precision.HIGHEST,
        )
        + bb.astype(jnp.float32)
    )
    assert out_bf.dtype == jnp.bfloat16
    assert jnp.max(jnp.abs(out_bf.astype(jnp.float32) - ref_bf)) < 3e-2, "mismatch (bf16)"

    # ---- Test 2: multi-tile grid (N tiling + K accumulation) ----
    b2, s2, k2d, n2 = 2, 128, 2048, 512
    x2 = jax.random.normal(k4, (b2, s2, k2d), dtype=jnp.float32)
    w2 = jax.random.normal(k5, (k2d, n2), dtype=jnp.float32) * 0.05
    bb2 = jax.random.normal(k6, (n2,), dtype=jnp.float32) * 0.1

    out2 = jax.block_until_ready(ipex_transformer_linear(x2, w2, bb2))
    # Reference with the same bf16 operand quantization, f32 accumulation.
    ref2 = (
        jnp.einsum(
            "bsk,kn->bsn",
            x2.astype(jnp.bfloat16).astype(jnp.float32),
            w2.astype(jnp.bfloat16).astype(jnp.float32),
            precision=jax.lax.Precision.HIGHEST,
        )
        + bb2
    )
    assert out2.shape == (b2, s2, n2)
    err = jnp.max(jnp.abs(out2 - ref2))
    assert err < 5e-3, f"mismatch vs reference (large), max abs err {err}"

    print("KERNEL_OK")
</pallas_src>

<mosaic_0001>
module attributes {stable_mosaic.version = 11 : i64} {
  func.func @_linear_kernel_f32out(%arg0: i32, %arg1: i32, %arg2: i32, %arg3: memref<64x128xf32, #tpu.memory_space<vmem>>, %arg4: memref<128x128xf32, #tpu.memory_space<vmem>>, %arg5: memref<1x128xf32, #tpu.memory_space<vmem>>, %arg6: memref<64x128xf32, #tpu.memory_space<vmem>>) attributes {dimension_semantics = [#tpu.dimension_semantics<parallel>, #tpu.dimension_semantics<parallel>, #tpu.dimension_semantics<arbitrary>], iteration_bounds = array<i64: 1, 1, 1>, scalar_prefetch = 0 : i64, scratch_operands = 0 : i64, tpu.core_type = #tpu.core_type<tc>, window_params = [{transform_indices = @transform_0, window_bounds = array<i64: 64, 128>}, {transform_indices = @transform_1, window_bounds = array<i64: 128, 128>}, {transform_indices = @transform_2, window_bounds = array<i64: 1, 128>}, {transform_indices = @transform_3, window_bounds = array<i64: 64, 128>}]} {
    %c0_i32 = arith.constant 0 : i32
    %0 = arith.cmpi eq, %arg2, %c0_i32 : i32
    %1 = arith.extui %0 : i1 to i32
    %c0_i32_0 = arith.constant 0 : i32
    %2 = arith.cmpi ne, %1, %c0_i32_0 : i32
    scf.if %2 {
      %cst_10 = arith.constant 0.000000e+00 : f32
      %14 = vector.broadcast %cst_10 : f32 to vector<64x128xf32>
      %c0_11 = arith.constant 0 : index
      %c0_12 = arith.constant 0 : index
      %15 = vector.load %arg6[%c0_11, %c0_12] : memref<64x128xf32, #tpu.memory_space<vmem>>, vector<64x128xf32>
      tpu.vector_store %arg6[%c0_11, %c0_12], %14 {strides = array<i32>} : memref<64x128xf32, #tpu.memory_space<vmem>>, vector<64x128xf32>,
    } else {
    }
    %c0 = arith.constant 0 : index
    %c0_1 = arith.constant 0 : index
    %3 = vector.load %arg6[%c0, %c0_1] : memref<64x128xf32, #tpu.memory_space<vmem>>, vector<64x128xf32>
    %c0_2 = arith.constant 0 : index
    %c0_3 = arith.constant 0 : index
    %4 = vector.load %arg3[%c0_2, %c0_3] : memref<64x128xf32, #tpu.memory_space<vmem>>, vector<64x128xf32>
    %5 = arith.truncf %4 : vector<64x128xf32> to vector<64x128xbf16>
    %c0_4 = arith.constant 0 : index
    %c0_5 = arith.constant 0 : index
    %6 = vector.load %arg4[%c0_4, %c0_5] : memref<128x128xf32, #tpu.memory_space<vmem>>, vector<128x128xf32>
    %7 = arith.truncf %6 : vector<128x128xf32> to vector<128x128xbf16>
    %cst = arith.constant dense<0.000000e+00> : vector<64x128xf32>
    %8 = tpu.matmul %5, %7, %cst {dimension_numbers = #tpu.dot_dimension_numbers<[1], [0], [0], [1], [0, 0, 1, 1], [], []>} : vector<64x128xbf16>, vector<128x128xbf16>, vector<64x128xf32> -> vector<64x128xf32>
    %9 = arith.addf %3, %8 : vector<64x128xf32>
    %c0_6 = arith.constant 0 : index
    %c0_7 = arith.constant 0 : index
    %10 = vector.load %arg6[%c0_6, %c0_7] : memref<64x128xf32, #tpu.memory_space<vmem>>, vector<64x128xf32>
    tpu.vector_store %arg6[%c0_6, %c0_7], %9 {strides = array<i32>} : memref<64x128xf32, #tpu.memory_space<vmem>>, vector<64x128xf32>,
    %c0_i32_8 = arith.constant 0 : i32
    %11 = arith.cmpi eq, %arg2, %c0_i32_8 : i32
    %12 = arith.extui %11 : i1 to i32
    %c0_i32_9 = arith.constant 0 : i32
    %13 = arith.cmpi ne, %12, %c0_i32_9 : i32
    scf.if %13 {
      %c0_10 = arith.constant 0 : index
      %c0_11 = arith.constant 0 : index
      %14 = vector.load %arg6[%c0_10, %c0_11] : memref<64x128xf32, #tpu.memory_space<vmem>>, vector<64x128xf32>
      %c0_12 = arith.constant 0 : index
      %c0_13 = arith.constant 0 : index
      %15 = vector.load %arg5[%c0_12, %c0_13] : memref<1x128xf32, #tpu.memory_space<vmem>>, vector<1x128xf32>
      %16 = vector.broadcast %15 : vector<1x128xf32> to vector<64x128xf32>
      %17 = arith.addf %14, %16 : vector<64x128xf32>
      %c0_14 = arith.constant 0 : index
      %c0_15 = arith.constant 0 : index
      %18 = vector.load %arg6[%c0_14, %c0_15] : memref<64x128xf32, #tpu.memory_space<vmem>>, vector<64x128xf32>
      tpu.vector_store %arg6[%c0_14, %c0_15], %17 {strides = array<i32>} : memref<64x128xf32, #tpu.memory_space<vmem>>, vector<64x128xf32>,
    } else {
    }
    return
  }
  func.func @transform_0(%arg0: i32, %arg1: i32, %arg2: i32) -> (i32, i32) {
    %c0_i32 = arith.constant 0 : i32
    return %arg0, %arg2 : i32, i32
  }
  func.func @transform_1(%arg0: i32, %arg1: i32, %arg2: i32) -> (i32, i32) {
    %c0_i32 = arith.constant 0 : i32
    return %arg2, %arg1 : i32, i32
  }
  func.func @transform_2(%arg0: i32, %arg1: i32, %arg2: i32) -> (i32, i32) {
    %c0_i32 = arith.constant 0 : i32
    %c0_i32_0 = arith.constant 0 : i32
    return %c0_i32, %arg1 : i32, i32
  }
  func.func @transform_3(%arg0: i32, %arg1: i32, %arg2: i32) -> (i32, i32) {
    %c0_i32 = arith.constant 0 : i32
    return %arg0, %arg1 : i32, i32
  }
}

</mosaic_0001>

<llo_original>
// kernel: tpu_custom_call.1
$region0: #{tpu_custom_call.1}
  #allocation0 [shape = 'u32[]', space=smem, size = 0x4, offset = 0x4, fixed_abs, tag = 'smem constant byte address 0x4 - core index']
  #allocation1 [shape = 'u32[144,128]{1,0:T(1,128)}', space=vmem, size = 0x12000, scoped, tag = 'internal scratch']
  %s0 = inlined_call_operand.hbm [shape: f32[64,128], index: 0, kind: input, shape index: {}]
  %s1 = inlined_call_operand.hbm [shape: f32[128,128], index: 1, kind: input, shape index: {}]
  %s2 = inlined_call_operand.vmem [shape: f32[1,128], index: 2, kind: input, shape index: {}]
  %s3 = inlined_call_operand.hbm [shape: f32[64,128], index: 3, kind: output, shape index: {}]
  %s4 = sld [smem:[#allocation0]]
  $region38: #{tpu_custom_call.1} parent=0
    _
  %s6 = ssub.s32 1, %s4
  %s7 = scalar_select 0, %s6, %s4
  $region1: #{tpu_custom_call.1} parent=0
    #allocation2 [shape = 'u8[32768]{0}', space=vmem, size = 0x8000, scoped, tag = 'input window, operand 0, single buffered']
    #allocation3 [shape = 's32[1]{0}', space=sflag, size = 0x4, scoped, tag = 'scoped memory for tpu_custom_call.1']
    #allocation4 [shape = 's32[1]{0}', space=sflag, size = 0x4, scoped, tag = 'scoped memory for tpu_custom_call.1']
    #allocation5 [shape = 'u8[65536]{0}', space=vmem, size = 0x10000, scoped, tag = 'input window, operand 1, single buffered']
    #allocation6 [shape = 's32[1]{0}', space=sflag, size = 0x4, scoped, tag = 'scoped memory for tpu_custom_call.1']
    #allocation7 [shape = 'u8[32768]{0}', space=vmem, size = 0x8000, scoped, tag = 'output window, operand 0, single buffered']
    %8 = vsyncpa [#allocation3], 0
    %9 = vsyncpa [#allocation6], 0
    %10 = vsyncpa [#allocation4], 0
    // Predicated region
    $region2: #{tpu_custom_call.1} parent=1 // pred_check
      _
    $region3: #{tpu_custom_call.1} parent=1 // pred_check_branch
      %12 = sbr.rel (0) target = $region5
    $region4: #{tpu_custom_call.1} parent=1 // pred_region
      %s14 = ssub.s32 1024, 1024
      %15 = vsyncadd [#allocation3], %s14
      %s16 = sshll.u32 [#allocation2], 4
      %s17 = int_to_ptr.vmem [resolvable:$true] %s16
      %22 = dma.hbm_to_vmem [thread:$0]  %s0, 1024, %s17, [#allocation3], 128, 128, 8
    $region5: #{tpu_custom_call.1} parent=1 // pred_fallthru
      _
    // Predicated region
    $region6: #{tpu_custom_call.1} parent=1 // pred_check
      _
    $region7: #{tpu_custom_call.1} parent=1 // pred_check_branch
      %24 = sbr.rel (0) target = $region9
    $region8: #{tpu_custom_call.1} parent=1 // pred_region
      %s26 = ssub.s32 2048, 2048
      %27 = vsyncadd [#allocation6], %s26
      %s28 = sshll.u32 [#allocation5], 4
      %s29 = int_to_ptr.vmem [resolvable:$true] %s28
      %34 = dma.hbm_to_vmem [thread:$0]  %s1, 2048, %s29, [#allocation6], 128, 128, 8
    $region9: #{tpu_custom_call.1} parent=1 // pred_fallthru
      _
    // Predicated region
    $region10: #{tpu_custom_call.1} parent=1 // pred_check
      _
    $region11: #{tpu_custom_call.1} parent=1 // pred_check_branch
      %36 = sbr.rel (0) target = $region13
    $region12: #{tpu_custom_call.1} parent=1 // pred_region
      _
    $region13: #{tpu_custom_call.1} parent=1 // pred_fallthru
      _
    // Predicated region
    $region14: #{tpu_custom_call.1} parent=1 // pred_check
      _
    $region15: #{tpu_custom_call.1} parent=1 // pred_check_branch
      %38 = sbr.rel (0) target = $region17
    $region16: #{tpu_custom_call.1} parent=1 // pred_region
      %39 = dma.done [#allocation3], 1024
    $region17: #{tpu_custom_call.1} parent=1 // pred_fallthru
      _
    // Predicated region
    $region18: #{tpu_custom_call.1} parent=1 // pred_check
      _
    $region19: #{tpu_custom_call.1} parent=1 // pred_check_branch
      %41 = sbr.rel (0) target = $region21
    $region20: #{tpu_custom_call.1} parent=1 // pred_region
      %42 = dma.done [#allocation6], 2048
    $region21: #{tpu_custom_call.1} parent=1 // pred_fallthru
      _
    %p44 = scmp.eq.s32.totalorder 0, 0
    // Predicated region
    $region22: #{tpu_custom_call.1} parent=1 // pred_check
      %p45 = pneg %p44
    $region23: #{tpu_custom_call.1} parent=1 // pred_check_branch
      %47 = sbr.rel (%p45) target = $region25
    $region24: #{tpu_custom_call.1} parent=1 // pred_region
      %48 = vst [vmem:[#allocation7] sm:$0xff] 0.0
      %49 = vst [vmem:[#allocation7 + $0x8] sm:$0xff] 0.0
      %50 = vst [vmem:[#allocation7 + $0x10] sm:$0xff] 0.0
      %51 = vst [vmem:[#allocation7 + $0x18] sm:$0xff] 0.0
      %52 = vst [vmem:[#allocation7 + $0x20] sm:$0xff] 0.0
      %53 = vst [vmem:[#allocation7 + $0x28] sm:$0xff] 0.0
      %54 = vst [vmem:[#allocation7 + $0x30] sm:$0xff] 0.0
      %55 = vst [vmem:[#allocation7 + $0x38] sm:$0xff] 0.0
    $region25: #{tpu_custom_call.1} parent=1 // pred_fallthru
      _
    %v56 = vld [vmem:[#allocation7] sm:$0xff]
    %v57 = vld [vmem:[#allocation7 + $0x8] sm:$0xff]
    %v58 = vld [vmem:[#allocation7 + $0x10] sm:$0xff]
    %v59 = vld [vmem:[#allocation7 + $0x18] sm:$0xff]
    %v60 = vld [vmem:[#allocation7 + $0x20] sm:$0xff]
    %v61 = vld [vmem:[#allocation7 + $0x28] sm:$0xff]
    %v62 = vld [vmem:[#allocation7 + $0x30] sm:$0xff]
    %v63 = vld [vmem:[#allocation7 + $0x38] sm:$0xff]
    %v64 = vld [vmem:[#allocation2] sm:$0xff]
    %v65 = vld [vmem:[#allocation2 + $0x8] sm:$0xff]
    %v66 = vld [vmem:[#allocation2 + $0x10] sm:$0xff]
    %v67 = vld [vmem:[#allocation2 + $0x18] sm:$0xff]
    %v68 = vld [vmem:[#allocation2 + $0x20] sm:$0xff]
    %v69 = vld [vmem:[#allocation2 + $0x28] sm:$0xff]
    %v70 = vld [vmem:[#allocation2 + $0x30] sm:$0xff]
    %v71 = vld [vmem:[#allocation2 + $0x38] sm:$0xff]
    %v72 = vpack.c.bf16 %v65, %v64
    %v73 = vpack.c.bf16 %v67, %v66
    %v74 = vpack.c.bf16 %v69, %v68
    %v75 = vpack.c.bf16 %v71, %v70
    %v76 = vld [vmem:[#allocation5] sm:$0xff]
    %v77 = vld [vmem:[#allocation5 + $0x8] sm:$0xff]
    %v78 = vld [vmem:[#allocation5 + $0x10] sm:$0xff]
    %v79 = vld [vmem:[#allocation5 + $0x18] sm:$0xff]
    %v80 = vld [vmem:[#allocation5 + $0x20] sm:$0xff]
    %v81 = vld [vmem:[#allocation5 + $0x28] sm:$0xff]
    %v82 = vld [vmem:[#allocation5 + $0x30] sm:$0xff]
    %v83 = vld [vmem:[#allocation5 + $0x38] sm:$0xff]
    %v84 = vld [vmem:[#allocation5 + $0x40] sm:$0xff]
    %v85 = vld [vmem:[#allocation5 + $0x48] sm:$0xff]
    %v86 = vld [vmem:[#allocation5 + $0x50] sm:$0xff]
    %v87 = vld [vmem:[#allocation5 + $0x58] sm:$0xff]
    %v88 = vld [vmem:[#allocation5 + $0x60] sm:$0xff]
    %v89 = vld [vmem:[#allocation5 + $0x68] sm:$0xff]
    %v90 = vld [vmem:[#allocation5 + $0x70] sm:$0xff]
    %v91 = vld [vmem:[#allocation5 + $0x78] sm:$0xff]
    %v92 = vpack.c.bf16 %v77, %v76
    %v93 = vpack.c.bf16 %v79, %v78
    %v94 = vpack.c.bf16 %v81, %v80
    %v95 = vpack.c.bf16 %v83, %v82
    %v96 = vpack.c.bf16 %v85, %v84
    %v97 = vpack.c.bf16 %v87, %v86
    %v98 = vpack.c.bf16 %v89, %v88
    %v99 = vpack.c.bf16 %v91, %v90
    %100 = vmatprep.subr.bf16.mxu0 0
    %101 = vmatpush1.bf16.msra.mxu0 %v92
    %102 = vmatprep.subr.bf16.mxu0 0
    %103 = vmatpush1.bf16.msra.mxu0 %v93
    %104 = vmatprep.subr.bf16.mxu0 0
    %105 = vmatpush1.bf16.msra.mxu0 %v94
    %106 = vmatprep.subr.bf16.mxu0 0
    %107 = vmatpush1.bf16.msra.mxu0 %v95
    %108 = vmatprep.subr.bf16.mxu0 0
    %109 = vmatpush1.bf16.msra.mxu0 %v96
    %110 = vmatprep.subr.bf16.mxu0 0
    %111 = vmatpush1.bf16.msra.mxu0 %v97
    %112 = vmatprep.subr.bf16.mxu0 0
    %113 = vmatpush1.bf16.msra.mxu0 %v98
    %114 = vmatprep.subr.bf16.mxu0 0
    %115 = vmatpush1.bf16.msra.mxu0 %v99
    %116 = vmatprep.subr.bf16.mxu0 0
    %117 = vmatpush1.bf16.msra.mxu0 0
    %118 = vmatprep.subr.bf16.mxu0 0
    %119 = vmatpush1.bf16.msra.mxu0 0
    %120 = vmatprep.subr.bf16.mxu0 0
    %121 = vmatpush1.bf16.msra.mxu0 0
    %122 = vmatprep.subr.bf16.mxu0 0
    %123 = vmatpush1.bf16.msra.mxu0 0
    %124 = vmatprep.subr.bf16.mxu0 0
    %125 = vmatpush1.bf16.msra.mxu0 0
    %126 = vmatprep.subr.bf16.mxu0 0
    %127 = vmatpush1.bf16.msra.mxu0 0
    %128 = vmatprep.subr.bf16.mxu0 0
    %129 = vmatpush1.bf16.msra.mxu0 0
    %130 = vmatprep.subr.bf16.mxu0 0
    %131 = vmatpush1.bf16.msra.mxu0 0
    %132 = vmatprep.mubr.bf16.mxu0 0
    %133 = vmatmul.mubr.bf16.gmra.mrb[0].mxu0 %v72
    %v134 = vpop.f32.mrb[0].mxu0
    %v135 = vadd.f32 0.0, %v134
    %v136 = vpop.f32.mrb[0].mxu0
    %v137 = vpop.f32.mrb[0].mxu0
    %v138 = vadd.f32 0.0, %v137
    %v139 = vpop.f32.mrb[0].mxu0
    %140 = vmatprep.mubr.bf16.mxu0 0
    %141 = vmatmul.mubr.bf16.gmra.mrb[0].mxu0 %v73
    %v142 = vpop.f32.mrb[0].mxu0
    %v143 = vadd.f32 0.0, %v142
    %v144 = vpop.f32.mrb[0].mxu0
    %v145 = vpop.f32.mrb[0].mxu0
    %v146 = vadd.f32 0.0, %v145
    %v147 = vpop.f32.mrb[0].mxu0
    %148 = vmatprep.mubr.bf16.mxu0 0
    %149 = vmatmul.mubr.bf16.gmra.mrb[0].mxu0 %v74
    %v150 = vpop.f32.mrb[0].mxu0
    %v151 = vadd.f32 0.0, %v150
    %v152 = vpop.f32.mrb[0].mxu0
    %v153 = vpop.f32.mrb[0].mxu0
    %v154 = vadd.f32 0.0, %v153
    %v155 = vpop.f32.mrb[0].mxu0
    %156 = vmatprep.mubr.bf16.mxu0 0
    %157 = vmatmul.mubr.bf16.gmra.mrb[0].mxu0 %v75
    %v158 = vpop.f32.mrb[0].mxu0
    %v159 = vadd.f32 0.0, %v158
    %v160 = vpop.f32.mrb[0].mxu0
    %v161 = vpop.f32.mrb[0].mxu0
    %v162 = vadd.f32 0.0, %v161
    %v163 = vpop.f32.mrb[0].mxu0
    %164 = vdwg.mxu0
    %v165 = vadd.f32 %v56, %v135
    %v166 = vadd.f32 %v57, %v138
    %v167 = vadd.f32 %v58, %v143
    %v168 = vadd.f32 %v59, %v146
    %v169 = vadd.f32 %v60, %v151
    %v170 = vadd.f32 %v61, %v154
    %v171 = vadd.f32 %v62, %v159
    %v172 = vadd.f32 %v63, %v162
    %173 = vst [vmem:[#allocation7] sm:$0xff] %v165
    %174 = vst [vmem:[#allocation7 + $0x8] sm:$0xff] %v166
    %175 = vst [vmem:[#allocation7 + $0x10] sm:$0xff] %v167
    %176 = vst [vmem:[#allocation7 + $0x18] sm:$0xff] %v168
    %177 = vst [vmem:[#allocation7 + $0x20] sm:$0xff] %v169
    %178 = vst [vmem:[#allocation7 + $0x28] sm:$0xff] %v170
    %179 = vst [vmem:[#allocation7 + $0x30] sm:$0xff] %v171
    %180 = vst [vmem:[#allocation7 + $0x38] sm:$0xff] %v172
    // Predicated region
    $region26: #{tpu_custom_call.1} parent=1 // pred_check
      %p181 = pneg %p44
    $region27: #{tpu_custom_call.1} parent=1 // pred_check_branch
      %183 = sbr.rel (%p181) target = $region29
    $region28: #{tpu_custom_call.1} parent=1 // pred_region
      %v184 = vld [vmem:[#allocation7] sm:$0xff]
      %v185 = vld [vmem:[#allocation7 + $0x8] sm:$0xff]
      %v186 = vld [vmem:[#allocation7 + $0x10] sm:$0xff]
      %v187 = vld [vmem:[#allocation7 + $0x18] sm:$0xff]
      %v188 = vld [vmem:[#allocation7 + $0x20] sm:$0xff]
      %v189 = vld [vmem:[#allocation7 + $0x28] sm:$0xff]
      %v190 = vld [vmem:[#allocation7 + $0x30] sm:$0xff]
      %v191 = vld [vmem:[#allocation7 + $0x38] sm:$0xff]
      %v192 = vld [vmem:[%s2] sm:$0x1]
      %v194 = vlaneseq
      %v195 = vshrl.u32 %v194, 7
      %v196 = vsub.s32 0, %v195
      %v197 = vrot.slane %v192, %v196
      %v199 = vadd.f32 %v184, %v197
      %v200 = vadd.f32 %v185, %v197
      %v201 = vadd.f32 %v186, %v197
      %v202 = vadd.f32 %v187, %v197
      %v203 = vadd.f32 %v188, %v197
      %v204 = vadd.f32 %v189, %v197
      %v205 = vadd.f32 %v190, %v197
      %v206 = vadd.f32 %v191, %v197
      %207 = vst [vmem:[#allocation7] sm:$0xff] %v199
      %208 = vst [vmem:[#allocation7 + $0x8] sm:$0xff] %v200
      %209 = vst [vmem:[#allocation7 + $0x10] sm:$0xff] %v201
      %210 = vst [vmem:[#allocation7 + $0x18] sm:$0xff] %v202
      %211 = vst [vmem:[#allocation7 + $0x20] sm:$0xff] %v203
      %212 = vst [vmem:[#allocation7 + $0x28] sm:$0xff] %v204
      %213 = vst [vmem:[#allocation7 + $0x30] sm:$0xff] %v205
      %214 = vst [vmem:[#allocation7 + $0x38] sm:$0xff] %v206
    $region29: #{tpu_custom_call.1} parent=1 // pred_fallthru
      _
    // Predicated region
    $region30: #{tpu_custom_call.1} parent=1 // pred_check
      _
    $region31: #{tpu_custom_call.1} parent=1 // pred_check_branch
      %216 = sbr.rel (0) target = $region33
    $region32: #{tpu_custom_call.1} parent=1 // pred_region
      %s218 = ssub.s32 1024, 1024
      %219 = vsyncadd [#allocation4], %s218
      %s220 = sshll.u32 [#allocation7], 4
      %s221 = int_to_ptr.vmem [resolvable:$true] %s220
      %226 = dma.vmem_to_hbm [thread:$0]  %s221, 1024, %s3, [#allocation4], 128, 128, 8
    $region33: #{tpu_custom_call.1} parent=1 // pred_fallthru
      _
    // Predicated region
    $region34: #{tpu_custom_call.1} parent=1 // pred_check
      _
    $region35: #{tpu_custom_call.1} parent=1 // pred_check_branch
      %228 = sbr.rel (0) target = $region37
    $region36: #{tpu_custom_call.1} parent=1 // pred_region
      %229 = dma.done [#allocation4], 1024
    $region37: #{tpu_custom_call.1} parent=1 // pred_fallthru
      _
    %230 = vsyncpa [#allocation3], 1
    %231 = vsyncpa [#allocation6], 1
    %232 = vsyncpa [#allocation4], 1

</llo_original>
